<compile_context>
chip_gen: v6e
topology: v6e:2x2x1
jax: 0.10.0
libtpu: 0.0.40
codegen_flags: <defaults>
</compile_context>

<pallas_src>
import functools

import jax
import jax.numpy as jnp
from jax.experimental import pallas as pl
from jax.experimental.pallas import tpu as pltpu


def _round_up(x: int, m: int) -> int:
    return (x + m - 1) // m * m


def _pick_block_batch(b: int, c: int, itemsize: int,
                      max_tile_bytes: int = 4 * 1024 * 1024,
                      max_rows: int = 1024) -> int:
    """Pick a batch tile: multiple of 8 sublanes, tile <= ~4 MiB, capped at 1024 rows."""
    rows = max(8, max_tile_bytes // max(1, c * itemsize))
    rows = min(rows, max_rows)
    rows = max(8, (rows // 8) * 8)
    return min(rows, _round_up(b, 8))


def _ce_label_smooth_kernel(x_ref, t_ref, loss_ref, *, eps: float, num_classes: int):
    # x_ref: (TB, C) logits block in VMEM; t_ref: (TB, 1) int32 labels in VMEM.
    x = x_ref[...].astype(jnp.float32)                    # compute in f32 always
    tb, c = x.shape
    t = t_ref[...]                                        # (TB, 1) int32

    # Fused row reductions — no (TB, C) float temporaries kept around.
    m = jnp.max(x, axis=1, keepdims=True)                 # (TB, 1)
    lse = jnp.log(jnp.sum(jnp.exp(x - m), axis=1, keepdims=True))
    mls = m + lse                                         # logsumexp per row
    sx = jnp.sum(x, axis=1, keepdims=True)                # sum of logits per row

    # x[target] via iota-compare feeding a select (no float one-hot materialized).
    class_ids = jax.lax.broadcasted_iota(jnp.int32, (tb, c), 1)
    xt = jnp.sum(jnp.where(class_ids == t, x, 0.0), axis=1, keepdims=True)

    # Per-row smoothed cross-entropy:
    #   (1-eps)*(m+lse - x[t]) + (eps/C)*(C*(m+lse) - sum(x))
    # NB: eps / num_classes uses the TRUE class count (class axis is never padded here).
    loss_ref[...] = ((1.0 - eps) * (mls - xt)
                     + (eps / num_classes) * (num_classes * mls - sx))


def cross_entropy_label_smooth(inputs, targets, eps: float = 0.1,
                               label_smooth: bool = True,
                               block_batch: int | None = None):
    """inputs: (B, C) float logits; targets: (B,) int labels. Returns scalar f32."""
    assert inputs.shape[0] == targets.shape[0]
    b, c = inputs.shape
    eff_eps = float(eps) if label_smooth else 0.0

    tb = block_batch or _pick_block_batch(b, c, inputs.dtype.itemsize)
    b_pad = _round_up(b, tb)
    num_tiles = pl.cdiv(b_pad, tb)

    x = inputs
    t = targets.astype(jnp.int32)
    if b_pad != b:
        # Padded rows produce garbage per-row losses but are sliced off below,
        # so no in-kernel row masking is needed.
        x = jnp.pad(x, ((0, b_pad - b), (0, 0)))
        t = jnp.pad(t, (0, b_pad - b))
    t2 = t.reshape(b_pad, 1)

    per_row = pl.pallas_call(
        functools.partial(_ce_label_smooth_kernel, eps=eff_eps, num_classes=c),
        out_shape=jax.ShapeDtypeStruct((b_pad, 1), jnp.float32),
        grid=(num_tiles,),
        in_specs=[
            pl.BlockSpec((tb, c), lambda i: (i, 0)),   # logits: stream batch tiles
            pl.BlockSpec((tb, 1), lambda i: (i, 0)),   # labels
        ],
        out_specs=pl.BlockSpec((tb, 1), lambda i: (i, 0)),
        compiler_params=pltpu.CompilerParams(
            dimension_semantics=("parallel",)),        # tiles independent (v7x: 2 TCs)
    )(x, t2)

    # (-smoothed * log_probs).mean(0).sum()  ==  sum(per_row_loss) / B  (true B).
    return jnp.sum(per_row[:b, 0]) / b


def _reference(inputs, targets, eps=0.1):
    c = inputs.shape[1]
    log_probs = jax.nn.log_softmax(inputs.astype(jnp.float32), axis=1)
    onehot = jax.nn.one_hot(targets, c, dtype=jnp.float32)
    smoothed = (1.0 - eps) * onehot + eps / c
    return jnp.sum(jnp.mean(-smoothed * log_probs, axis=0))


if __name__ == "__main__":
    key = jax.random.PRNGKey(0)
    k_x, k_t, k_x2, k_t2 = jax.random.split(key, 4)

    # Small demo shape consistent with the module: (batch, num_classes) logits.
    batch, num_classes = 8, 16
    x = jax.random.normal(k_x, (batch, num_classes), dtype=jnp.float32)
    t = jax.random.randint(k_t, (batch,), 0, num_classes, dtype=jnp.int32)

    loss = jax.block_until_ready(cross_entropy_label_smooth(x, t, eps=0.1,
                                                            label_smooth=True))
    ref = _reference(x, t, eps=0.1)
    assert jnp.allclose(loss, ref, atol=1e-5, rtol=1e-5), (loss, ref)

    # Second check: batch not a multiple of 8 (exercises the padding + slice path)
    # and eps=0 (plain cross entropy).
    b2, c2 = 10, 16
    x2 = jax.random.normal(k_x2, (b2, c2), dtype=jnp.float32)
    t2 = jax.random.randint(k_t2, (b2,), 0, c2, dtype=jnp.int32)
    loss2 = jax.block_until_ready(cross_entropy_label_smooth(x2, t2, eps=0.1,
                                                             label_smooth=False))
    ref2 = _reference(x2, t2, eps=0.0)
    assert jnp.allclose(loss2, ref2, atol=1e-5, rtol=1e-5), (loss2, ref2)

    print("KERNEL_OK")
</pallas_src>

<mosaic_0001>
module attributes {stable_mosaic.version = 11 : i64} {
  func.func @_ce_label_smooth_kernel(%arg0: i32, %arg1: memref<8x16xf32, #tpu.memory_space<vmem>>, %arg2: memref<8x1xi32, #tpu.memory_space<vmem>>, %arg3: memref<8x1xf32, #tpu.memory_space<vmem>>) attributes {dimension_semantics = [#tpu.dimension_semantics<parallel>], iteration_bounds = array<i64: 1>, scalar_prefetch = 0 : i64, scratch_operands = 0 : i64, tpu.core_type = #tpu.core_type<tc>, window_params = [{transform_indices = @transform_0, window_bounds = array<i64: 8, 16>}, {transform_indices = @transform_1, window_bounds = array<i64: 8, 1>}, {transform_indices = @transform_2, window_bounds = array<i64: 8, 1>}]} {
    %c0 = arith.constant 0 : index
    %c0_0 = arith.constant 0 : index
    %0 = vector.load %arg1[%c0, %c0_0] : memref<8x16xf32, #tpu.memory_space<vmem>>, vector<8x16xf32>
    %c0_1 = arith.constant 0 : index
    %c0_2 = arith.constant 0 : index
    %1 = vector.load %arg2[%c0_1, %c0_2] : memref<8x1xi32, #tpu.memory_space<vmem>>, vector<8x1xi32>
    %cst = arith.constant dense<0xFF800000> : vector<8xf32>
    %2 = vector.multi_reduction <maximumf>, %0, %cst [1] : vector<8x16xf32> to vector<8xf32>
    %3 = vector.shape_cast %2 : vector<8xf32> to vector<8x1xf32>
    %4 = vector.broadcast %3 : vector<8x1xf32> to vector<8x16xf32>
    %5 = arith.subf %0, %4 : vector<8x16xf32>
    %6 = math.exp %5 : vector<8x16xf32>
    %cst_3 = arith.constant dense<0.000000e+00> : vector<8xf32>
    %7 = vector.multi_reduction <add>, %6, %cst_3 [1] : vector<8x16xf32> to vector<8xf32>
    %8 = vector.shape_cast %7 : vector<8xf32> to vector<8x1xf32>
    %9 = math.log %8 : vector<8x1xf32>
    %10 = arith.addf %3, %9 : vector<8x1xf32>
    %cst_4 = arith.constant dense<0.000000e+00> : vector<8xf32>
    %11 = vector.multi_reduction <add>, %0, %cst_4 [1] : vector<8x16xf32> to vector<8xf32>
    %12 = vector.shape_cast %11 : vector<8xf32> to vector<8x1xf32>
    %13 = tpu.iota {dimensions = array<i32: 1>} : vector<8x16xi32>
    %14 = vector.broadcast %1 : vector<8x1xi32> to vector<8x16xi32>
    %15 = arith.cmpi eq, %13, %14 : vector<8x16xi32>
    %cst_5 = arith.constant 0.000000e+00 : f32
    %16 = vector.broadcast %cst_5 : f32 to vector<8x16xf32>
    %17 = arith.select %15, %0, %16 : vector<8x16xi1>, vector<8x16xf32>
    %cst_6 = arith.constant dense<0.000000e+00> : vector<8xf32>
    %18 = vector.multi_reduction <add>, %17, %cst_6 [1] : vector<8x16xf32> to vector<8xf32>
    %19 = vector.shape_cast %18 : vector<8xf32> to vector<8x1xf32>
    %20 = arith.subf %10, %19 : vector<8x1xf32>
    %cst_7 = arith.constant 0.899999976 : f32
    %21 = vector.broadcast %cst_7 : f32 to vector<8x1xf32>
    %22 = arith.mulf %21, %20 : vector<8x1xf32>
    %cst_8 = arith.constant 1.600000e+01 : f32
    %23 = vector.broadcast %cst_8 : f32 to vector<8x1xf32>
    %24 = arith.mulf %23, %10 : vector<8x1xf32>
    %25 = arith.subf %24, %12 : vector<8x1xf32>
    %cst_9 = arith.constant 6.250000e-03 : f32
    %26 = vector.broadcast %cst_9 : f32 to vector<8x1xf32>
    %27 = arith.mulf %26, %25 : vector<8x1xf32>
    %28 = arith.addf %22, %27 : vector<8x1xf32>
    %c0_10 = arith.constant 0 : index
    %c0_11 = arith.constant 0 : index
    %29 = vector.load %arg3[%c0_10, %c0_11] : memref<8x1xf32, #tpu.memory_space<vmem>>, vector<8x1xf32>
    tpu.vector_store %arg3[%c0_10, %c0_11], %28 {strides = array<i32>} : memref<8x1xf32, #tpu.memory_space<vmem>>, vector<8x1xf32>,
    return
  }
  func.func @transform_0(%arg0: i32) -> (i32, i32) {
    %c0_i32 = arith.constant 0 : i32
    %c0_i32_0 = arith.constant 0 : i32
    return %arg0, %c0_i32 : i32, i32
  }
  func.func @transform_1(%arg0: i32) -> (i32, i32) {
    %c0_i32 = arith.constant 0 : i32
    %c0_i32_0 = arith.constant 0 : i32
    return %arg0, %c0_i32 : i32, i32
  }
  func.func @transform_2(%arg0: i32) -> (i32, i32) {
    %c0_i32 = arith.constant 0 : i32
    %c0_i32_0 = arith.constant 0 : i32
    return %arg0, %c0_i32 : i32, i32
  }
}

</mosaic_0001>

<llo_original>
// kernel: tpu_custom_call.1
$region0: #{tpu_custom_call.1}
  #allocation0 [shape = 'u32[]', space=smem, size = 0x4, offset = 0x4, fixed_abs, tag = 'smem constant byte address 0x4 - core index']
  #allocation1 [shape = 'u32[144,128]{1,0:T(1,128)}', space=vmem, size = 0x12000, scoped, tag = 'internal scratch']
  %s0 = inlined_call_operand.vmem [shape: f32[8,16], index: 0, kind: input, shape index: {}]
  %s1 = inlined_call_operand.vmem [shape: s32[8,1], index: 1, kind: input, shape index: {}]
  %s2 = inlined_call_operand.vmem [shape: f32[8,1], index: 2, kind: output, shape index: {}]
  %s3 = sld [smem:[#allocation0]]
  $region18: #{tpu_custom_call.1} parent=0
    _
  %s5 = ssub.s32 1, %s3
  %s6 = scalar_select 0, %s5, %s3
  // Predicated region
  $region2: #{tpu_custom_call.1} parent=0 // pred_check
    _
  $region3: #{tpu_custom_call.1} parent=0 // pred_check_branch
    %8 = sbr.rel (0) target = $region5
  $region4: #{tpu_custom_call.1} parent=0 // pred_region
    _
  $region5: #{tpu_custom_call.1} parent=0 // pred_fallthru
    _
  // Predicated region
  $region6: #{tpu_custom_call.1} parent=0 // pred_check
    _
  $region7: #{tpu_custom_call.1} parent=0 // pred_check_branch
    %10 = sbr.rel (0) target = $region9
  $region8: #{tpu_custom_call.1} parent=0 // pred_region
    _
  $region9: #{tpu_custom_call.1} parent=0 // pred_fallthru
    _
  %v11 = vld [vmem:[%s0] sm:$0xff]
  %v12 = vld [vmem:[%s1] sm:$0xff]
  %vm13 = vcmask 130048
  %v14 = vsel %vm13, %v11, -inf
  %15 = vmax.xlane.f32.xlu0 %v14
  %v16 = vpop.xlane.xlu0 %15
  %v17 = vsub.f32 %v11, %v16
  %v18 = vmul.f32 %v17, 1.442695
  %v19 = vpow.pop %v18
  %v20 = vsel %vm13, %v19, 0.0
  %21 = vadd.xlane.f32.xlu0 %v20
  %v22 = vpop.xlane.xlu0 %21
  %v23 = vlog2.pop %v22
  %v24 = vmul.f32 %v23, 0.6931472
  %v25 = vadd.f32 %v16, %v24
  %v26 = vsel %vm13, %v11, 0.0
  %27 = vadd.xlane.f32.xlu0 %v26
  %v28 = vpop.xlane.xlu0 %27
  %v29 = vlaneseq
  %v30 = vand.u32 %v29, 127
  %31 = vset.pattern.permute.xlu0 0
  %32 = vperm.xlu0 %31, %v12
  %v33 = vpop.permute.xlu0 %32
  %vm34 = vcmp.eq.s32.totalorder %v30, %v33
  %v35 = vsel %vm34, %v11, 0.0
  %v36 = vsel %vm13, %v35, 0.0
  %37 = vadd.xlane.f32.xlu0 %v36
  %v38 = vpop.xlane.xlu0 %37
  %v39 = vsub.f32 %v25, %v38
  %v40 = vmul.f32 %v39, 0.9
  %v41 = vmul.f32 %v25, 16.0
  %v42 = vsub.f32 %v41, %v28
  %v43 = vmul.f32 %v42, 0.00625
  %v44 = vadd.f32 %v40, %v43
  %vm45 = vcmask 7168
  %46 = vst.msk [vmem:[%s2] sm:$0xff] %vm45, %v44
  // Predicated region
  $region10: #{tpu_custom_call.1} parent=0 // pred_check
    _
  $region11: #{tpu_custom_call.1} parent=0 // pred_check_branch
    %48 = sbr.rel (0) target = $region13
  $region12: #{tpu_custom_call.1} parent=0 // pred_region
    _
  $region13: #{tpu_custom_call.1} parent=0 // pred_fallthru
    _
  // Predicated region
  $region14: #{tpu_custom_call.1} parent=0 // pred_check
    _
  $region15: #{tpu_custom_call.1} parent=0 // pred_check_branch
    %50 = sbr.rel (0) target = $region17
  $region16: #{tpu_custom_call.1} parent=0 // pred_region
    _
  $region17: #{tpu_custom_call.1} parent=0 // pred_fallthru
    _

</llo_original>
